<compile_context>
chip_gen: v6e
topology: v6e:2x2x1
jax: 0.10.0
libtpu: 0.0.40
codegen_flags: <defaults>
</compile_context>

<pallas_src>
import functools

import jax
import jax.numpy as jnp
from jax.experimental import pallas as pl
from jax.experimental.pallas import tpu as pltpu


def _cnn_kernel(x_ref, w_ref, b_ref, o_ref, *, kernel_size, l_out, n_filters):
    """Conv1d + ReLU + full-length MaxPool for one batch tile (one grid step).

    x_ref : (TB, C, L)   native PyTorch Conv1d input layout
    w_ref : (K*F, C)     taps stacked k-major: row k*F + f == weight[f, :, k]
    b_ref : (1, F)
    o_ref : (TB, F)
    """
    tb = x_ref.shape[0]
    w_all = w_ref[...]                                    # load once, reuse across the tile

    pooled = jnp.zeros((tb, n_filters), jnp.float32)
    batch_iota = jax.lax.broadcasted_iota(jnp.int32, (tb, 1), 0)

    for b in range(tb):                                   # static unroll, single launch
        # All K taps in one MXU matmul (contraction = C): y[k*F+f, l] = sum_c w[f,c,k] x[c,l].
        y = jnp.dot(w_all, x_ref[b], preferred_element_type=jnp.float32)   # (K*F, L)
        # Shift-align the K row groups and sum: acc[f, t] = sum_k y[k*F+f, t+k].
        acc = y[0:n_filters, 0:l_out]
        for k in range(1, kernel_size):
            acc = acc + y[k * n_filters:(k + 1) * n_filters, k:k + l_out]
        row = jnp.max(acc, axis=1)[None, :]               # (1, F): max-pool over all positions
        pooled = jnp.where(batch_iota == b, row, pooled)  # place row b (no partial stores)

    # Bias + ReLU after the pool (equivalent: per-filter constant bias, monotone ReLU).
    o_ref[...] = jnp.maximum(pooled + b_ref[...], 0.0).astype(o_ref.dtype)


def prepare_cnn_params(weight_fck, bias_f):
    """One-time layout prep.

    PyTorch Conv1d weight (F, C, K) -> W_all (K*F, C), rows k-major so that row
    k*F + f holds weight[f, :, k]; bias (F,) -> (1, F).
    """
    n_filters, _, kernel_size = weight_fck.shape
    w_all = jnp.transpose(weight_fck, (2, 0, 1)).reshape(kernel_size * n_filters, -1)
    b_1f = bias_f.reshape(1, n_filters)
    return w_all, b_1f


def cnn_forward(x_bcl, w_all, b_1f, *, kernel_size, batch_tile=None):
    """x_bcl: (B, C_in, L), exactly the PyTorch module's input layout (no transposes here)."""
    B, C, L = x_bcl.shape
    F = b_1f.shape[-1]
    assert w_all.shape == (kernel_size * F, C), w_all.shape
    l_out = L - kernel_size + 1
    assert l_out >= 1, f"sequence length {L} shorter than kernel_size {kernel_size}"

    # Tiny batches run as a single whole-batch grid step; larger batches are tiled into a
    # "parallel" grid axis (bounds the VMEM block; uses the 2nd TensorCore on v7x).
    if batch_tile is None:
        batch_tile = B if B <= 8 else 8
    batch_tile = min(batch_tile, B)
    assert batch_tile == B or batch_tile % 8 == 0, batch_tile
    num_tiles = pl.cdiv(B, batch_tile)   # edge blocks are padded by Pallas; padded rows dropped

    x_bytes = jnp.dtype(x_bcl.dtype).itemsize
    flops = 2 * B * l_out * C * kernel_size * F
    bytes_accessed = int(x_bcl.size * x_bytes
                         + w_all.size * jnp.dtype(w_all.dtype).itemsize
                         + b_1f.size * jnp.dtype(b_1f.dtype).itemsize
                         + B * F * x_bytes)

    out = pl.pallas_call(
        functools.partial(_cnn_kernel, kernel_size=kernel_size, l_out=l_out, n_filters=F),
        out_shape=jax.ShapeDtypeStruct((B, F), x_bcl.dtype),
        grid_spec=pltpu.PrefetchScalarGridSpec(
            num_scalar_prefetch=0,
            grid=(num_tiles,),
            in_specs=[
                pl.BlockSpec((batch_tile, C, L), lambda i: (i, 0, 0)),
                pl.BlockSpec((kernel_size * F, C), lambda i: (0, 0)),
                pl.BlockSpec((1, F), lambda i: (0, 0)),
            ],
            out_specs=pl.BlockSpec((batch_tile, F), lambda i: (i, 0)),
        ),
        compiler_params=pltpu.CompilerParams(
            dimension_semantics=("parallel",),
        ),
        cost_estimate=pl.CostEstimate(
            flops=flops, transcendentals=0, bytes_accessed=bytes_accessed),
    )(x_bcl, w_all, b_1f)

    # PyTorch `.squeeze()` removes all size-1 dims; no-op for B, F > 1, kept for parity.
    return jnp.squeeze(out)


def _reference_forward(x, w, b, kernel_size):
    """Pure-JAX reference of the PyTorch module for verification."""
    l_out = x.shape[-1] - kernel_size + 1
    conv = jnp.zeros((x.shape[0], w.shape[0], l_out), jnp.float32)
    for k in range(kernel_size):
        conv = conv + jnp.einsum("bcl,fc->bfl", x[:, :, k:k + l_out], w[:, :, k])
    conv = conv + b[None, :, None]
    return jnp.squeeze(jnp.max(jnp.maximum(conv, 0.0), axis=-1, keepdims=True))


if __name__ == "__main__":
    # Module defaults: embed_char_size=50, kernel_size=5, filters=2, max_word_length=50
    batch = 2
    embed_char_size = 50
    kernel_size = 5
    filters = 2
    max_word_length = 50

    key = jax.random.PRNGKey(0)
    kx, kw, kb = jax.random.split(key, 3)
    x = jax.random.normal(kx, (batch, embed_char_size, max_word_length), jnp.float32)
    weight = jax.random.normal(
        kw, (filters, embed_char_size, kernel_size), jnp.float32) * 0.1
    bias = jax.random.normal(kb, (filters,), jnp.float32) * 0.1

    # Weight/bias layout prep done once (hoisted out of the per-call path).
    w_all, b_1f = prepare_cnn_params(weight, bias)

    out = cnn_forward(x, w_all, b_1f, kernel_size=kernel_size)
    out = jax.block_until_ready(out)

    ref = _reference_forward(x, weight, bias, kernel_size)
    assert out.shape == (batch, filters), out.shape
    assert jnp.allclose(out, ref, atol=1e-5, rtol=1e-5), (out, ref)

    print("KERNEL_OK")
</pallas_src>

<mosaic_0001>
module attributes {stable_mosaic.version = 11 : i64} {
  func.func @_cnn_kernel(%arg0: i32, %arg1: memref<2x50x50xf32, #tpu.memory_space<vmem>>, %arg2: memref<10x50xf32, #tpu.memory_space<vmem>>, %arg3: memref<1x2xf32, #tpu.memory_space<vmem>>, %arg4: memref<2x2xf32, #tpu.memory_space<vmem>>) attributes {dimension_semantics = [#tpu.dimension_semantics<parallel>], iteration_bounds = array<i64: 1>, scalar_prefetch = 0 : i64, scratch_operands = 0 : i64, tpu.core_type = #tpu.core_type<tc>, window_params = [{transform_indices = @transform_0, window_bounds = array<i64: 2, 50, 50>}, {pipeline_mode = #tpu.pipeline_mode<synchronous>, transform_indices = @transform_1, window_bounds = array<i64: 10, 50>}, {pipeline_mode = #tpu.pipeline_mode<synchronous>, transform_indices = @transform_2, window_bounds = array<i64: 1, 2>}, {transform_indices = @transform_3, window_bounds = array<i64: 2, 2>}]} {
    %c0 = arith.constant 0 : index
    %c0_0 = arith.constant 0 : index
    %0 = vector.load %arg2[%c0, %c0_0] : memref<10x50xf32, #tpu.memory_space<vmem>>, vector<10x50xf32>
    %cst = arith.constant 0.000000e+00 : f32
    %1 = vector.broadcast %cst : f32 to vector<2x2xf32>
    %2 = tpu.iota {dimensions = array<i32: 0>} : vector<2x1xi32>
    %c0_1 = arith.constant 0 : index
    %c0_2 = arith.constant 0 : index
    %c0_3 = arith.constant 0 : index
    %3 = vector.load %arg1[%c0_1, %c0_2, %c0_3] : memref<2x50x50xf32, #tpu.memory_space<vmem>>, vector<1x50x50xf32>
    %4 = vector.shape_cast %3 : vector<1x50x50xf32> to vector<50x50xf32>
    %cst_4 = arith.constant dense<0.000000e+00> : vector<10x50xf32>
    %5 = tpu.matmul %0, %4, %cst_4 {dimension_numbers = #tpu.dot_dimension_numbers<[1], [0], [0], [1], [0, 0, 1, 1], [], []>} : vector<10x50xf32>, vector<50x50xf32>, vector<10x50xf32> -> vector<10x50xf32>
    %6 = vector.extract_strided_slice %5 {offsets = [0, 0], sizes = [2, 46], strides = [1, 1]} : vector<10x50xf32> to vector<2x46xf32>
    %7 = vector.extract_strided_slice %5 {offsets = [2, 1], sizes = [2, 46], strides = [1, 1]} : vector<10x50xf32> to vector<2x46xf32>
    %8 = arith.addf %6, %7 : vector<2x46xf32>
    %9 = vector.extract_strided_slice %5 {offsets = [4, 2], sizes = [2, 46], strides = [1, 1]} : vector<10x50xf32> to vector<2x46xf32>
    %10 = arith.addf %8, %9 : vector<2x46xf32>
    %11 = vector.extract_strided_slice %5 {offsets = [6, 3], sizes = [2, 46], strides = [1, 1]} : vector<10x50xf32> to vector<2x46xf32>
    %12 = arith.addf %10, %11 : vector<2x46xf32>
    %13 = vector.extract_strided_slice %5 {offsets = [8, 4], sizes = [2, 46], strides = [1, 1]} : vector<10x50xf32> to vector<2x46xf32>
    %14 = arith.addf %12, %13 : vector<2x46xf32>
    %cst_5 = arith.constant dense<0xFF800000> : vector<2xf32>
    %15 = vector.multi_reduction <maximumf>, %14, %cst_5 [1] : vector<2x46xf32> to vector<2xf32>
    %16 = vector.shape_cast %15 : vector<2xf32> to vector<1x2xf32>
    %c0_i32 = arith.constant 0 : i32
    %17 = vector.broadcast %c0_i32 : i32 to vector<2x1xi32>
    %18 = arith.cmpi eq, %2, %17 : vector<2x1xi32>
    %19 = vector.shape_cast %18 : vector<2x1xi1> to vector<2x1xi1>
    %20 = vector.broadcast %19 : vector<2x1xi1> to vector<2x2xi1>
    %21 = vector.shape_cast %16 : vector<1x2xf32> to vector<1x2xf32>
    %22 = vector.broadcast %21 : vector<1x2xf32> to vector<2x2xf32>
    %23 = arith.select %20, %22, %1 : vector<2x2xi1>, vector<2x2xf32>
    %c1 = arith.constant 1 : index
    %c0_6 = arith.constant 0 : index
    %c0_7 = arith.constant 0 : index
    %24 = vector.load %arg1[%c1, %c0_6, %c0_7] : memref<2x50x50xf32, #tpu.memory_space<vmem>>, vector<1x50x50xf32>
    %25 = vector.shape_cast %24 : vector<1x50x50xf32> to vector<50x50xf32>
    %cst_8 = arith.constant dense<0.000000e+00> : vector<10x50xf32>
    %26 = tpu.matmul %0, %25, %cst_8 {dimension_numbers = #tpu.dot_dimension_numbers<[1], [0], [0], [1], [0, 0, 1, 1], [], []>} : vector<10x50xf32>, vector<50x50xf32>, vector<10x50xf32> -> vector<10x50xf32>
    %27 = vector.extract_strided_slice %26 {offsets = [0, 0], sizes = [2, 46], strides = [1, 1]} : vector<10x50xf32> to vector<2x46xf32>
    %28 = vector.extract_strided_slice %26 {offsets = [2, 1], sizes = [2, 46], strides = [1, 1]} : vector<10x50xf32> to vector<2x46xf32>
    %29 = arith.addf %27, %28 : vector<2x46xf32>
    %30 = vector.extract_strided_slice %26 {offsets = [4, 2], sizes = [2, 46], strides = [1, 1]} : vector<10x50xf32> to vector<2x46xf32>
    %31 = arith.addf %29, %30 : vector<2x46xf32>
    %32 = vector.extract_strided_slice %26 {offsets = [6, 3], sizes = [2, 46], strides = [1, 1]} : vector<10x50xf32> to vector<2x46xf32>
    %33 = arith.addf %31, %32 : vector<2x46xf32>
    %34 = vector.extract_strided_slice %26 {offsets = [8, 4], sizes = [2, 46], strides = [1, 1]} : vector<10x50xf32> to vector<2x46xf32>
    %35 = arith.addf %33, %34 : vector<2x46xf32>
    %cst_9 = arith.constant dense<0xFF800000> : vector<2xf32>
    %36 = vector.multi_reduction <maximumf>, %35, %cst_9 [1] : vector<2x46xf32> to vector<2xf32>
    %37 = vector.shape_cast %36 : vector<2xf32> to vector<1x2xf32>
    %c1_i32 = arith.constant 1 : i32
    %38 = vector.broadcast %c1_i32 : i32 to vector<2x1xi32>
    %39 = arith.cmpi eq, %2, %38 : vector<2x1xi32>
    %40 = vector.shape_cast %39 : vector<2x1xi1> to vector<2x1xi1>
    %41 = vector.broadcast %40 : vector<2x1xi1> to vector<2x2xi1>
    %42 = vector.shape_cast %37 : vector<1x2xf32> to vector<1x2xf32>
    %43 = vector.broadcast %42 : vector<1x2xf32> to vector<2x2xf32>
    %44 = arith.select %41, %43, %23 : vector<2x2xi1>, vector<2x2xf32>
    %c0_10 = arith.constant 0 : index
    %c0_11 = arith.constant 0 : index
    %45 = vector.load %arg3[%c0_10, %c0_11] : memref<1x2xf32, #tpu.memory_space<vmem>>, vector<1x2xf32>
    %46 = vector.broadcast %45 : vector<1x2xf32> to vector<2x2xf32>
    %47 = arith.addf %44, %46 : vector<2x2xf32>
    %cst_12 = arith.constant 0.000000e+00 : f32
    %48 = vector.broadcast %cst_12 : f32 to vector<2x2xf32>
    %49 = arith.maximumf %47, %48 : vector<2x2xf32>
    %c0_13 = arith.constant 0 : index
    %c0_14 = arith.constant 0 : index
    %50 = vector.load %arg4[%c0_13, %c0_14] : memref<2x2xf32, #tpu.memory_space<vmem>>, vector<2x2xf32>
    tpu.vector_store %arg4[%c0_13, %c0_14], %49 {strides = array<i32>} : memref<2x2xf32, #tpu.memory_space<vmem>>, vector<2x2xf32>,
    return
  }
  func.func @transform_0(%arg0: i32) -> (i32, i32, i32) {
    %c0_i32 = arith.constant 0 : i32
    %c0_i32_0 = arith.constant 0 : i32
    %c0_i32_1 = arith.constant 0 : i32
    return %arg0, %c0_i32, %c0_i32_0 : i32, i32, i32
  }
  func.func @transform_1(%arg0: i32) -> (i32, i32) {
    %c0_i32 = arith.constant 0 : i32
    %c0_i32_0 = arith.constant 0 : i32
    %c0_i32_1 = arith.constant 0 : i32
    return %c0_i32, %c0_i32_0 : i32, i32
  }
  func.func @transform_2(%arg0: i32) -> (i32, i32) {
    %c0_i32 = arith.constant 0 : i32
    %c0_i32_0 = arith.constant 0 : i32
    %c0_i32_1 = arith.constant 0 : i32
    return %c0_i32, %c0_i32_0 : i32, i32
  }
  func.func @transform_3(%arg0: i32) -> (i32, i32) {
    %c0_i32 = arith.constant 0 : i32
    %c0_i32_0 = arith.constant 0 : i32
    return %arg0, %c0_i32 : i32, i32
  }
}

</mosaic_0001>

<llo_original>
// kernel: tpu_custom_call.1
$region0: #{tpu_custom_call.1}
  #allocation0 [shape = 'u32[]', space=smem, size = 0x4, offset = 0x4, fixed_abs, tag = 'smem constant byte address 0x4 - core index']
  #allocation1 [shape = 'u32[144,128]{1,0:T(1,128)}', space=vmem, size = 0x12000, scoped, tag = 'internal scratch']
  %s0 = inlined_call_operand.vmem [shape: f32[2,50,50], index: 0, kind: input, shape index: {}]
  %s1 = inlined_call_operand.vmem [shape: f32[10,50], index: 1, kind: input, shape index: {}]
  %s2 = inlined_call_operand.vmem [shape: f32[1,2], index: 2, kind: input, shape index: {}]
  %s3 = inlined_call_operand.hbm [shape: f32[2,2], index: 3, kind: output, shape index: {}]
  %s4 = sld [smem:[#allocation0]]
  $region22: #{tpu_custom_call.1} parent=0
    _
  %s6 = ssub.s32 1, %s4
  %s7 = scalar_select 0, %s6, %s4
  $region1: #{tpu_custom_call.1} parent=0
    #allocation2 [shape = 'u8[1024]{0}', space=vmem, size = 0x400, scoped, tag = 'output window, operand 0, single buffered']
    #allocation3 [shape = 's32[1]{0}', space=sflag, size = 0x4, scoped, tag = 'scoped memory for tpu_custom_call.1']
    %8 = vsyncpa [#allocation3], 0
    // Predicated region
    $region2: #{tpu_custom_call.1} parent=1 // pred_check
      _
    $region3: #{tpu_custom_call.1} parent=1 // pred_check_branch
      %10 = sbr.rel (0) target = $region5
    $region4: #{tpu_custom_call.1} parent=1 // pred_region
      _
    $region5: #{tpu_custom_call.1} parent=1 // pred_fallthru
      _
    // Predicated region
    $region6: #{tpu_custom_call.1} parent=1 // pred_check
      _
    $region7: #{tpu_custom_call.1} parent=1 // pred_check_branch
      %12 = sbr.rel (0) target = $region9
    $region8: #{tpu_custom_call.1} parent=1 // pred_region
      _
    $region9: #{tpu_custom_call.1} parent=1 // pred_fallthru
      _
    // Predicated region
    $region10: #{tpu_custom_call.1} parent=1 // pred_check
      _
    $region11: #{tpu_custom_call.1} parent=1 // pred_check_branch
      %14 = sbr.rel (0) target = $region13
    $region12: #{tpu_custom_call.1} parent=1 // pred_region
      _
    $region13: #{tpu_custom_call.1} parent=1 // pred_fallthru
      _
    %v15 = vld [vmem:[%s1] sm:$0xff]
    %v16 = vld [vmem:[%s1 + $0x8] sm:$0x3]
    %v17 = vlaneseq
    %v18 = vshrl.u32 %v17, 7
    %v19 = vld [vmem:[%s0] sm:$0xff]
    %v20 = vld [vmem:[%s0 + $0x8] sm:$0xff]
    %v21 = vld [vmem:[%s0 + $0x10] sm:$0xff]
    %v22 = vld [vmem:[%s0 + $0x18] sm:$0xff]
    %v23 = vld [vmem:[%s0 + $0x20] sm:$0xff]
    %v24 = vld [vmem:[%s0 + $0x28] sm:$0xff]
    %v25 = vld [vmem:[%s0 + $0x30] sm:$0x3]
    %vm26 = vcmask 408576
    %v28 = vsel %vm26, %v15, 0
    %v31 = vsel %vm26, %v16, 0
    %vm33 = vcmask 1041408
    %v35 = vsel %vm33, %v25, 0
    %37 = vmatprep.subr.mxu0 0.0
    %38 = vmatpush1.msra.mxu0 0.0
    %39 = vmatprep.subr.mxu0 0.0
    %40 = vmatpush1.msra.mxu0 0.0
    %41 = vmatprep.subr.mxu0 0.0
    %42 = vmatpush1.msra.mxu0 0.0
    %43 = vmatprep.subr.mxu0 0.0
    %44 = vmatpush1.msra.mxu0 0.0
    %45 = vmatprep.subr.mxu0 0.0
    %46 = vmatpush1.msra.mxu0 0.0
    %47 = vmatprep.subr.mxu0 0.0
    %48 = vmatpush1.msra.mxu0 0.0
    %49 = vmatprep.subr.mxu0 0.0
    %50 = vmatpush1.msra.mxu0 0.0
    %51 = vmatprep.subr.mxu0 0.0
    %52 = vmatpush1.msra.mxu0 0.0
    %53 = vmatprep.subr.mxu0 0.0
    %54 = vmatpush1.msra.mxu0 0.0
    %55 = vmatprep.subr.mxu0 0.0
    %56 = vmatpush1.msra.mxu0 %v35
    %57 = vmatprep.subr.mxu0 0.0
    %58 = vmatpush1.msra.mxu0 %v24
    %59 = vmatprep.subr.mxu0 0.0
    %60 = vmatpush1.msra.mxu0 %v23
    %61 = vmatprep.subr.mxu0 0.0
    %62 = vmatpush1.msra.mxu0 %v22
    %63 = vmatprep.subr.mxu0 0.0
    %64 = vmatpush1.msra.mxu0 %v21
    %65 = vmatprep.subr.mxu0 0.0
    %66 = vmatpush1.msra.mxu0 %v20
    %67 = vmatprep.subr.mxu0 0.0
    %68 = vmatpush1.msra.mxu0 %v19
    %69 = vmatprep.subr.mxu0 0.0
    %70 = vmatpush2.msra.mxu0 0.0
    %71 = vmatprep.subr.mxu0 0.0
    %72 = vmatpush2.msra.mxu0 0.0
    %73 = vmatprep.subr.mxu0 0.0
    %74 = vmatpush2.msra.mxu0 0.0
    %75 = vmatprep.subr.mxu0 0.0
    %76 = vmatpush2.msra.mxu0 0.0
    %77 = vmatprep.subr.mxu0 0.0
    %78 = vmatpush2.msra.mxu0 0.0
    %79 = vmatprep.subr.mxu0 0.0
    %80 = vmatpush2.msra.mxu0 0.0
    %81 = vmatprep.subr.mxu0 0.0
    %82 = vmatpush2.msra.mxu0 0.0
    %83 = vmatprep.subr.mxu0 0.0
    %84 = vmatpush2.msra.mxu0 0.0
    %85 = vmatprep.subr.mxu0 0.0
    %86 = vmatpush2.msra.mxu0 0.0
    %87 = vmatprep.subr.mxu0 0.0
    %88 = vmatpush2.msra.mxu0 0.0
    %89 = vmatprep.subr.mxu0 0.0
    %90 = vmatpush2.msra.mxu0 0.0
    %91 = vmatprep.subr.mxu0 0.0
    %92 = vmatpush2.msra.mxu0 0.0
    %93 = vmatprep.subr.mxu0 0.0
    %94 = vmatpush2.msra.mxu0 0.0
    %95 = vmatprep.subr.mxu0 0.0
    %96 = vmatpush2.msra.mxu0 0.0
    %97 = vmatprep.subr.mxu0 0.0
    %98 = vmatpush2.msra.mxu0 0.0
    %99 = vmatprep.subr.mxu0 0.0
    %100 = vmatpush2.msra.mxu0 0.0
    %101 = vmatprep.mubr.f32.mxu0 0.0
    %102 = vmatmul.mubr.f32.gmra.mxu0 %v28
    %v103 = vpop.f32.mrf.mxu0
    %v104 = vadd.f32 0.0, %v103
    %v105 = vpop.f32.mrf.mxu0
    %106 = vmatprep.mubr.f32.mxu0 0.0
    %107 = vmatmul.mubr.f32.gmra.mxu0 %v31
    %v108 = vpop.f32.mrf.mxu0
    %v109 = vadd.f32 0.0, %v108
    %v110 = vpop.f32.mrf.mxu0
    %111 = vdwg.mxu0
    %v113 = vrot.slane %v104, 2
    %114 = vrot.lane.b32.xlu0 %v113, 127
    %v115 = vpop.permute.xlu0 %114
    %v117 = vadd.f32 %v104, %v115
    %v118 = vrot.slane %v104, 4
    %119 = vrot.lane.b32.xlu0 %v118, 126
    %v120 = vpop.permute.xlu0 %119
    %v122 = vadd.f32 %v117, %v120
    %v123 = vrot.slane %v104, 6
    %124 = vrot.lane.b32.xlu0 %v123, 125
    %v125 = vpop.permute.xlu0 %124
    %v127 = vadd.f32 %v122, %v125
    %129 = vrot.lane.b32.xlu0 %v109, 124
    %v130 = vpop.permute.xlu0 %129
    %v132 = vadd.f32 %v127, %v130
    %vm133 = vcmask 369664
    %v134 = vsel %vm133, %v132, -inf
    %135 = vmax.xlane.f32.xlu0 %v134
    %v136 = vpop.xlane.xlu0 %135
    %vm137 = vcmp.eq.s32.totalorder %v18, 0
    %v138 = vsel %vm137, 1, 0
    %vm139 = vcmp.eq.s32.totalorder %v138, 1
    %v141 = vlaneseq
    %v142 = vand.u32 %v141, 127
    %v143 = vlaneseq
    %v144 = vshrl.u32 %v143, 7
    %v145 = vsub.s32 %v142, %v144
    %v146 = vrot.slane %v136, %v145
    %v148 = vsel %vm139, %v146, 0.0
    %s149 = scalar_lea.vmem %s0, 56
    %v150 = vld [vmem:[%s149] sm:$0xff]
    %v151 = vld [vmem:[%s149 + $0x8] sm:$0xff]
    %v152 = vld [vmem:[%s149 + $0x10] sm:$0xff]
    %v153 = vld [vmem:[%s149 + $0x18] sm:$0xff]
    %v154 = vld [vmem:[%s149 + $0x20] sm:$0xff]
    %v155 = vld [vmem:[%s149 + $0x28] sm:$0xff]
    %v156 = vld [vmem:[%s149 + $0x30] sm:$0x3]
    %v158 = vsel %vm33, %v156, 0
    %160 = vmatprep.subr.mxu0 0.0
    %161 = vmatpush1.msra.mxu0 0.0
    %162 = vmatprep.subr.mxu0 0.0
    %163 = vmatpush1.msra.mxu0 0.0
    %164 = vmatprep.subr.mxu0 0.0
    %165 = vmatpush1.msra.mxu0 0.0
    %166 = vmatprep.subr.mxu0 0.0
    %167 = vmatpush1.msra.mxu0 0.0
    %168 = vmatprep.subr.mxu0 0.0
    %169 = vmatpush1.msra.mxu0 0.0
    %170 = vmatprep.subr.mxu0 0.0
    %171 = vmatpush1.msra.mxu0 0.0
    %172 = vmatprep.subr.mxu0 0.0
    %173 = vmatpush1.msra.mxu0 0.0
    %174 = vmatprep.subr.mxu0 0.0
    %175 = vmatpush1.msra.mxu0 0.0
    %176 = vmatprep.subr.mxu0 0.0
    %177 = vmatpush1.msra.mxu0 0.0
    %178 = vmatprep.subr.mxu0 0.0
    %179 = vmatpush1.msra.mxu0 %v158
    %180 = vmatprep.subr.mxu0 0.0
    %181 = vmatpush1.msra.mxu0 %v155
    %182 = vmatprep.subr.mxu0 0.0
    %183 = vmatpush1.msra.mxu0 %v154
    %184 = vmatprep.subr.mxu0 0.0
    %185 = vmatpush1.msra.mxu0 %v153
    %186 = vmatprep.subr.mxu0 0.0
    %187 = vmatpush1.msra.mxu0 %v152
    %188 = vmatprep.subr.mxu0 0.0
    %189 = vmatpush1.msra.mxu0 %v151
    %190 = vmatprep.subr.mxu0 0.0
    %191 = vmatpush1.msra.mxu0 %v150
    %192 = vmatprep.subr.mxu0 0.0
    %193 = vmatpush2.msra.mxu0 0.0
    %194 = vmatprep.subr.mxu0 0.0
    %195 = vmatpush2.msra.mxu0 0.0
    %196 = vmatprep.subr.mxu0 0.0
    %197 = vmatpush2.msra.mxu0 0.0
    %198 = vmatprep.subr.mxu0 0.0
    %199 = vmatpush2.msra.mxu0 0.0
    %200 = vmatprep.subr.mxu0 0.0
    %201 = vmatpush2.msra.mxu0 0.0
    %202 = vmatprep.subr.mxu0 0.0
    %203 = vmatpush2.msra.mxu0 0.0
    %204 = vmatprep.subr.mxu0 0.0
    %205 = vmatpush2.msra.mxu0 0.0
    %206 = vmatprep.subr.mxu0 0.0
    %207 = vmatpush2.msra.mxu0 0.0
    %208 = vmatprep.subr.mxu0 0.0
    %209 = vmatpush2.msra.mxu0 0.0
    %210 = vmatprep.subr.mxu0 0.0
    %211 = vmatpush2.msra.mxu0 0.0
    %212 = vmatprep.subr.mxu0 0.0
    %213 = vmatpush2.msra.mxu0 0.0
    %214 = vmatprep.subr.mxu0 0.0
    %215 = vmatpush2.msra.mxu0 0.0
    %216 = vmatprep.subr.mxu0 0.0
    %217 = vmatpush2.msra.mxu0 0.0
    %218 = vmatprep.subr.mxu0 0.0
    %219 = vmatpush2.msra.mxu0 0.0
    %220 = vmatprep.subr.mxu0 0.0
    %221 = vmatpush2.msra.mxu0 0.0
    %222 = vmatprep.subr.mxu0 0.0
    %223 = vmatpush2.msra.mxu0 0.0
    %224 = vmatprep.mubr.f32.mxu0 0.0
    %225 = vmatmul.mubr.f32.gmra.mxu0 %v28
    %v226 = vpop.f32.mrf.mxu0
    %v227 = vadd.f32 0.0, %v226
    %v228 = vpop.f32.mrf.mxu0
    %229 = vmatprep.mubr.f32.mxu0 0.0
    %230 = vmatmul.mubr.f32.gmra.mxu0 %v31
    %v231 = vpop.f32.mrf.mxu0
    %v232 = vadd.f32 0.0, %v231
    %v233 = vpop.f32.mrf.mxu0
    %234 = vdwg.mxu0
    %v236 = vrot.slane %v227, 2
    %237 = vrot.lane.b32.xlu0 %v236, 127
    %v238 = vpop.permute.xlu0 %237
    %v240 = vadd.f32 %v227, %v238
    %v241 = vrot.slane %v227, 4
    %242 = vrot.lane.b32.xlu0 %v241, 126
    %v243 = vpop.permute.xlu0 %242
    %v245 = vadd.f32 %v240, %v243
    %v246 = vrot.slane %v227, 6
    %247 = vrot.lane.b32.xlu0 %v246, 125
    %v248 = vpop.permute.xlu0 %247
    %v250 = vadd.f32 %v245, %v248
    %252 = vrot.lane.b32.xlu0 %v232, 124
    %v253 = vpop.permute.xlu0 %252
    %v255 = vadd.f32 %v250, %v253
    %v256 = vsel %vm133, %v255, -inf
    %257 = vmax.xlane.f32.xlu0 %v256
    %v258 = vpop.xlane.xlu0 %257
    %vm259 = vcmp.eq.s32.totalorder %v18, 1
    %v260 = vsel %vm259, 1, 0
    %vm261 = vcmp.eq.s32.totalorder %v260, 1
    %v263 = vlaneseq
    %v264 = vshrl.u32 %v263, 7
    %v265 = vsub.s32 %v142, %v264
    %v266 = vrot.slane %v258, %v265
    %v268 = vsel %vm261, %v266, %v148
    %v269 = vld [vmem:[%s2] sm:$0x1]
    %v271 = vlaneseq
    %v272 = vshrl.u32 %v271, 7
    %v273 = vsub.s32 0, %v272
    %v274 = vrot.slane %v269, %v273
    %v276 = vadd.f32 %v268, %v274
    %v277 = vmax.f32 %v276, 0.0
    %vm278 = vcmask 9216
    %279 = vst.msk [vmem:[#allocation2] sm:$0x3] %vm278, %v277
    // Predicated region
    $region14: #{tpu_custom_call.1} parent=1 // pred_check
      _
    $region15: #{tpu_custom_call.1} parent=1 // pred_check_branch
      %281 = sbr.rel (0) target = $region17
    $region16: #{tpu_custom_call.1} parent=1 // pred_region
      %s283 = ssub.s32 32, 32
      %284 = vsyncadd [#allocation3], %s283
      %s286 = sshll.u32 [#allocation2], 4
      %s287 = int_to_ptr.vmem [resolvable:$true] %s286
      %289 = dma.vmem_to_hbm [thread:$0]  %s287, 32, %s3, [#allocation3]
    $region17: #{tpu_custom_call.1} parent=1 // pred_fallthru
      _
    // Predicated region
    $region18: #{tpu_custom_call.1} parent=1 // pred_check
      _
    $region19: #{tpu_custom_call.1} parent=1 // pred_check_branch
      %291 = sbr.rel (0) target = $region21
    $region20: #{tpu_custom_call.1} parent=1 // pred_region
      %292 = dma.done [#allocation3], 32
    $region21: #{tpu_custom_call.1} parent=1 // pred_fallthru
      _
    %293 = vsyncpa [#allocation3], 1

</llo_original>
